<compile_context>
chip_gen: v6e
topology: v6e:2x2x1
jax: 0.10.0
libtpu: 0.0.40
codegen_flags: <defaults>
</compile_context>

<pallas_src>
import jax
import jax.numpy as jnp
from jax.experimental import pallas as pl
from jax.experimental.pallas import tpu as pltpu


def _round_up(x, m):
    return (x + m - 1) // m * m


# ---------------------------------------------------------------------------
# Generation-aware budgets
# ---------------------------------------------------------------------------
def _choose_budgets():
    """Return (per_x_buffer_bytes, vmem_limit_bytes) for this TPU generation."""
    try:
        vmem_cap = pltpu.get_tpu_info().vmem_capacity_bytes
    except Exception:  # pragma: no cover - fall back to the tightest budget
        vmem_cap = 64 * 1024 * 1024
    if vmem_cap >= 96 * 1024 * 1024:
        # v5e / v6e: 128 MiB physical VMEM per core.
        per_buffer = 20 * 1024 * 1024
        vmem_limit = 64 * 1024 * 1024
    else:
        # v7x: 64 MiB physical VMEM per TensorCore, 3.2 TB/s HBM.
        per_buffer = 12 * 1024 * 1024
        vmem_limit = 44 * 1024 * 1024
    # Budget sanity: 2 x per_buffer (double-buffered x) + <= 1 x per_buffer of
    # in-flight f32 temporaries stays under vmem_limit on every generation.
    return per_buffer, vmem_limit


def _auto_tile_m(b_pad8, row_bytes, per_buffer):
    """Pick the batch tile size (rows, multiple of 8) from the VMEM budget."""
    max_rows = per_buffer // row_bytes
    if max_rows >= 1024:
        max_rows = (max_rows // 1024) * 1024  # q multiple of 128 for full tiles
    else:
        max_rows = max(8, (max_rows // 8) * 8)

    if b_pad8 <= max_rows:
        # Whole batch fits in one tile; still split in two when big enough so
        # both v7x TensorCores stream HBM.
        num_tiles = 2 if b_pad8 >= 2048 else 1
    else:
        num_tiles = -(-b_pad8 // max_rows)
        if num_tiles % 2:
            num_tiles += 1  # balanced even split across 2 TCs (no straggler)

    per_tile = -(-b_pad8 // num_tiles)
    t8 = _round_up(per_tile, 8)
    t1024 = _round_up(per_tile, 1024)
    # Prefer q = tile_m/8 a multiple of 128 (unmasked output stores) when the
    # extra zero-padded rows it implies are <= ~6% of the tile.
    if t1024 <= max_rows and (t1024 - t8) * 16 <= t8:
        return t1024
    return t8


# ---------------------------------------------------------------------------
# Kernel
# ---------------------------------------------------------------------------
_D_CHUNK = 512  # lanes per reduction chunk (multiple of 128)


def _make_logreg_kernel(D):
    # Chunk the feature reduction so an (8, q, chunk) f32 product temporary is
    # the largest thing ever materialized besides the streamed x tile itself.
    if D > _D_CHUNK and D % _D_CHUNK == 0:
        bounds = [(c * _D_CHUNK, _D_CHUNK) for c in range(D // _D_CHUNK)]
    else:
        bounds = [(0, D)]

    def kernel(x_ref, w_ref, b_ref, o_ref):
        # x_ref: (8, q, D) tile of input rows  (VMEM, streamed)
        # w_ref: (1, D) lane-dense weight row  (VMEM, resident)
        # b_ref: (1, 1) scalar bias            (SMEM)
        # o_ref: (8, q) lane-dense output tile (VMEM)
        acc = jnp.zeros(o_ref.shape, jnp.float32)
        for lo, sz in bounds:  # static, unrolled chunk loop
            xc = x_ref[:, :, lo:lo + sz].astype(jnp.float32)
            wc = w_ref[:, lo:lo + sz].astype(jnp.float32)
            acc = acc + jnp.sum(xc * wc, axis=-1)  # VPU mul + lane reduce
        o_ref[...] = (acc + b_ref[0, 0]).astype(o_ref.dtype)

    return kernel


# ---------------------------------------------------------------------------
# Wrapper
# ---------------------------------------------------------------------------
def logistic_regression_forward(x, w_row, b, *, tile_m=None):
    """Compute x @ w_row.T + b (torch nn.Linear(D, 1) semantics) on TPU.

    x:     (B, D)
    w_row: (1, D)   (torch nn.Linear(D, 1).weight layout)
    b:     (1, 1)
    returns (B, 1)
    """
    B, D = x.shape
    assert w_row.shape == (1, D) and b.shape == (1, 1)

    per_buffer, vmem_limit = _choose_budgets()
    itemsize = jnp.dtype(x.dtype).itemsize
    row_bytes = D * itemsize

    if 8 * row_bytes > per_buffer:
        # TODO(synk): K-tile the feature axis (second "arbitrary" grid axis +
        # f32 (8, q) accumulator with pl.when init/finalize) for this regime.
        raise NotImplementedError(
            "input_size too large for a single 8-row tile; K-tiling not implemented")

    b_pad8 = _round_up(B, 8)
    if tile_m is None:
        tile_m = _auto_tile_m(b_pad8, row_bytes, per_buffer)
    else:
        tile_m = max(8, (tile_m // 8) * 8)

    num_tiles = -(-b_pad8 // tile_m)
    b_pad = num_tiles * tile_m
    q = tile_m // 8

    if b_pad != B:
        x = jnp.pad(x, ((0, b_pad - B), (0, 0)))

    # Free row-major reshape: grid step i sees rows [i*tile_m, (i+1)*tile_m) as
    # an (8, q, D) block, and the per-row results land lane-dense in an (8, q)
    # output tile.
    x3 = x.reshape(num_tiles * 8, q, D)

    out2d = pl.pallas_call(
        _make_logreg_kernel(D),
        out_shape=jax.ShapeDtypeStruct((num_tiles * 8, q), x.dtype),
        grid=(num_tiles,),
        in_specs=[
            pl.BlockSpec((8, q, D), lambda i: (i, 0, 0)),        # x rows, streamed
            pl.BlockSpec((1, D), lambda i: (0, 0)),              # weight, lane-dense
            pl.BlockSpec(memory_space=pltpu.MemorySpace.SMEM),   # scalar bias
        ],
        out_specs=pl.BlockSpec((8, q), lambda i: (i, 0)),
        compiler_params=pltpu.CompilerParams(
            dimension_semantics=("parallel",),  # shard batch tiles across TCs (v7x)
            vmem_limit_bytes=vmem_limit,
        ),
        cost_estimate=pl.CostEstimate(
            flops=2 * b_pad * D,
            transcendentals=0,
            bytes_accessed=itemsize * (b_pad * D + D + 1 + b_pad),
        ),
    )(x3, w_row, b)

    return out2d.reshape(b_pad, 1)[:B]


def init_params(key, input_size):
    # Deterministic init mimicking nn.Linear: U(-1/sqrt(in), 1/sqrt(in)).
    k_w, k_b = jax.random.split(key)
    bound = 1.0 / (input_size ** 0.5)
    w_row = jax.random.uniform(k_w, (1, input_size), jnp.float32, -bound, bound)
    b = jax.random.uniform(k_b, (1, 1), jnp.float32, -bound, bound)
    return w_row, b


if __name__ == "__main__":
    key = jax.random.PRNGKey(0)
    k_x, k_p, k_x2 = jax.random.split(key, 3)

    # Primary small check (shapes consistent with the module's forward).
    batch, input_size = 8, 32
    x = jax.random.normal(k_x, (batch, input_size), jnp.float32)
    w_row, b = init_params(k_p, input_size)

    out = jax.block_until_ready(logistic_regression_forward(x, w_row, b))
    ref = x @ w_row.T + b
    assert out.shape == (batch, 1)
    assert jnp.allclose(out, ref, atol=1e-5, rtol=1e-5)

    # Second small check exercising a multi-tile grid + batch padding.
    batch2, input_size2 = 40, 128
    x2 = jax.random.normal(k_x2, (batch2, input_size2), jnp.float32)
    w2, b2 = init_params(k_p, input_size2)
    out2 = jax.block_until_ready(
        logistic_regression_forward(x2, w2, b2, tile_m=16))
    ref2 = x2 @ w2.T + b2
    assert out2.shape == (batch2, 1)
    assert jnp.allclose(out2, ref2, atol=1e-4, rtol=1e-4)

    print("KERNEL_OK")
</pallas_src>

<mosaic_0001>
module attributes {stable_mosaic.version = 11 : i64} {
  func.func @kernel(%arg0: i32, %arg1: memref<8x1x32xf32, #tpu.memory_space<vmem>>, %arg2: memref<1x32xf32, #tpu.memory_space<vmem>>, %arg3: memref<1x1xf32, #tpu.memory_space<smem>>, %arg4: memref<8x1xf32, #tpu.memory_space<vmem>>) attributes {dimension_semantics = [#tpu.dimension_semantics<parallel>], iteration_bounds = array<i64: 1>, scalar_prefetch = 0 : i64, scratch_operands = 0 : i64, tpu.core_type = #tpu.core_type<tc>, window_params = [{transform_indices = @transform_0, window_bounds = array<i64: 8, 1, 32>}, {pipeline_mode = #tpu.pipeline_mode<synchronous>, transform_indices = @transform_1, window_bounds = array<i64: 1, 32>}, {transform_indices = @transform_2, window_bounds = array<i64: 1, 1>}, {transform_indices = @transform_3, window_bounds = array<i64: 8, 1>}]} {
    %cst = arith.constant 0.000000e+00 : f32
    %0 = vector.broadcast %cst : f32 to vector<8x1xf32>
    %c0 = arith.constant 0 : index
    %c0_0 = arith.constant 0 : index
    %c0_1 = arith.constant 0 : index
    %1 = vector.load %arg1[%c0, %c0_0, %c0_1] : memref<8x1x32xf32, #tpu.memory_space<vmem>>, vector<8x1x32xf32>
    %c0_2 = arith.constant 0 : index
    %c0_3 = arith.constant 0 : index
    %2 = vector.load %arg2[%c0_2, %c0_3] : memref<1x32xf32, #tpu.memory_space<vmem>>, vector<1x32xf32>
    %3 = vector.shape_cast %2 : vector<1x32xf32> to vector<1x1x32xf32>
    %4 = vector.broadcast %3 : vector<1x1x32xf32> to vector<8x1x32xf32>
    %5 = arith.mulf %1, %4 : vector<8x1x32xf32>
    %cst_4 = arith.constant dense<0.000000e+00> : vector<8x1xf32>
    %6 = vector.multi_reduction <add>, %5, %cst_4 [2] : vector<8x1x32xf32> to vector<8x1xf32>
    %7 = arith.addf %0, %6 : vector<8x1xf32>
    %c0_5 = arith.constant 0 : index
    %c0_6 = arith.constant 0 : index
    %8 = memref.load %arg3[%c0_5, %c0_6] : memref<1x1xf32, #tpu.memory_space<smem>>
    %9 = vector.broadcast %8 : f32 to vector<8x1xf32>
    %10 = arith.addf %7, %9 : vector<8x1xf32>
    %c0_7 = arith.constant 0 : index
    %c0_8 = arith.constant 0 : index
    %11 = vector.load %arg4[%c0_7, %c0_8] : memref<8x1xf32, #tpu.memory_space<vmem>>, vector<8x1xf32>
    tpu.vector_store %arg4[%c0_7, %c0_8], %10 {strides = array<i32>} : memref<8x1xf32, #tpu.memory_space<vmem>>, vector<8x1xf32>,
    return
  }
  func.func @transform_0(%arg0: i32) -> (i32, i32, i32) {
    %c0_i32 = arith.constant 0 : i32
    %c0_i32_0 = arith.constant 0 : i32
    %c0_i32_1 = arith.constant 0 : i32
    return %arg0, %c0_i32, %c0_i32_0 : i32, i32, i32
  }
  func.func @transform_1(%arg0: i32) -> (i32, i32) {
    %c0_i32 = arith.constant 0 : i32
    %c0_i32_0 = arith.constant 0 : i32
    %c0_i32_1 = arith.constant 0 : i32
    return %c0_i32, %c0_i32_0 : i32, i32
  }
  func.func @transform_2(%arg0: i32) -> (i32, i32) {
    %c0_i32 = arith.constant 0 : i32
    %c0_i32_0 = arith.constant 0 : i32
    %c0_i32_1 = arith.constant 0 : i32
    return %c0_i32, %c0_i32_0 : i32, i32
  }
  func.func @transform_3(%arg0: i32) -> (i32, i32) {
    %c0_i32 = arith.constant 0 : i32
    %c0_i32_0 = arith.constant 0 : i32
    return %arg0, %c0_i32 : i32, i32
  }
}

</mosaic_0001>

<llo_original>
// kernel: tpu_custom_call.1
$region0: #{tpu_custom_call.1}
  #allocation0 [shape = 'u32[]', space=smem, size = 0x4, offset = 0x4, fixed_abs, tag = 'smem constant byte address 0x4 - core index']
  #allocation1 [shape = 'u32[144,128]{1,0:T(1,128)}', space=vmem, size = 0x12000, scoped, tag = 'internal scratch']
  #allocation2 [shape = 'f32[1,1]{1,0:T(1,128)S(6)}', space=smem, size = 0x200, scoped, tag = 'scoped memory for tpu_custom_call.1']
  %s0 = inlined_call_operand.hbm [shape: f32[8,1,32], index: 0, kind: input, shape index: {}]
  %s1 = inlined_call_operand.vmem [shape: f32[1,32], index: 1, kind: input, shape index: {}]
  %s2 = inlined_call_operand.<no memory space> [shape: f32[1,1], index: 2, kind: input, shape index: {}]
  %s3 = inlined_call_operand.vmem [shape: f32[8,1], index: 3, kind: output, shape index: {}]
  %s4 = sld [smem:[#allocation0]]
  $region26: #{tpu_custom_call.1} parent=0
    _
  %s6 = ssub.s32 1, %s4
  %s7 = scalar_select 0, %s6, %s4
  %8 = sst [smem:[#allocation2]] %s2
  $region1: #{tpu_custom_call.1} parent=0
    #allocation3 [shape = 'u8[4096]{0}', space=vmem, size = 0x1000, scoped, tag = 'input window, operand 0, single buffered']
    #allocation4 [shape = 's32[1]{0}', space=sflag, size = 0x4, scoped, tag = 'scoped memory for tpu_custom_call.1']
    %9 = vsyncpa [#allocation4], 0
    // Predicated region
    $region2: #{tpu_custom_call.1} parent=1 // pred_check
      _
    $region3: #{tpu_custom_call.1} parent=1 // pred_check_branch
      %11 = sbr.rel (0) target = $region5
    $region4: #{tpu_custom_call.1} parent=1 // pred_region
      %s13 = ssub.s32 128, 128
      %14 = vsyncadd [#allocation4], %s13
      %s15 = sshll.u32 [#allocation3], 4
      %s16 = int_to_ptr.vmem [resolvable:$true] %s15
      %21 = dma.hbm_to_vmem [thread:$0]  %s0, 128, %s16, [#allocation4], 16, 16, 1
    $region5: #{tpu_custom_call.1} parent=1 // pred_fallthru
      _
    // Predicated region
    $region6: #{tpu_custom_call.1} parent=1 // pred_check
      _
    $region7: #{tpu_custom_call.1} parent=1 // pred_check_branch
      %23 = sbr.rel (0) target = $region9
    $region8: #{tpu_custom_call.1} parent=1 // pred_region
      _
    $region9: #{tpu_custom_call.1} parent=1 // pred_fallthru
      _
    // Predicated region
    $region10: #{tpu_custom_call.1} parent=1 // pred_check
      _
    $region11: #{tpu_custom_call.1} parent=1 // pred_check_branch
      %25 = sbr.rel (0) target = $region13
    $region12: #{tpu_custom_call.1} parent=1 // pred_region
      _
    $region13: #{tpu_custom_call.1} parent=1 // pred_fallthru
      _
    // Predicated region
    $region14: #{tpu_custom_call.1} parent=1 // pred_check
      _
    $region15: #{tpu_custom_call.1} parent=1 // pred_check_branch
      %27 = sbr.rel (0) target = $region17
    $region16: #{tpu_custom_call.1} parent=1 // pred_region
      %28 = dma.done [#allocation4], 128
    $region17: #{tpu_custom_call.1} parent=1 // pred_fallthru
      _
    %v29 = vld [vmem:[#allocation3] sm:$0x1]
    %v30 = vld [vmem:[#allocation3 + $0x1] sm:$0x1]
    %v31 = vld [vmem:[#allocation3 + $0x2] sm:$0x1]
    %v32 = vld [vmem:[#allocation3 + $0x3] sm:$0x1]
    %v33 = vld [vmem:[#allocation3 + $0x4] sm:$0x1]
    %v34 = vld [vmem:[#allocation3 + $0x5] sm:$0x1]
    %v35 = vld [vmem:[#allocation3 + $0x6] sm:$0x1]
    %v36 = vld [vmem:[#allocation3 + $0x7] sm:$0x1]
    %v37 = vld [vmem:[%s1] sm:$0x1]
    %v38 = vmul.f32 %v29, %v37
    %v39 = vmul.f32 %v30, %v37
    %v40 = vmul.f32 %v31, %v37
    %v41 = vmul.f32 %v32, %v37
    %v42 = vmul.f32 %v33, %v37
    %v43 = vmul.f32 %v34, %v37
    %v44 = vmul.f32 %v35, %v37
    %v45 = vmul.f32 %v36, %v37
    %vm46 = vcmask 253952
    %v47 = vsel %vm46, %v38, 0.0
    %48 = vadd.xlane.f32.xlu0 %v47
    %v49 = vpop.xlane.xlu0 %48
    %v50 = vsel %vm46, %v39, 0.0
    %51 = vadd.xlane.f32.xlu0 %v50
    %v52 = vpop.xlane.xlu0 %51
    %v53 = vsel %vm46, %v40, 0.0
    %54 = vadd.xlane.f32.xlu0 %v53
    %v55 = vpop.xlane.xlu0 %54
    %v56 = vsel %vm46, %v41, 0.0
    %57 = vadd.xlane.f32.xlu0 %v56
    %v58 = vpop.xlane.xlu0 %57
    %v59 = vsel %vm46, %v42, 0.0
    %60 = vadd.xlane.f32.xlu0 %v59
    %v61 = vpop.xlane.xlu0 %60
    %v62 = vsel %vm46, %v43, 0.0
    %63 = vadd.xlane.f32.xlu0 %v62
    %v64 = vpop.xlane.xlu0 %63
    %v65 = vsel %vm46, %v44, 0.0
    %66 = vadd.xlane.f32.xlu0 %v65
    %v67 = vpop.xlane.xlu0 %66
    %v68 = vsel %vm46, %v45, 0.0
    %69 = vadd.xlane.f32.xlu0 %v68
    %v70 = vpop.xlane.xlu0 %69
    %v71 = vadd.f32 %v49, 0.0
    %v72 = vadd.f32 %v52, 0.0
    %v73 = vadd.f32 %v55, 0.0
    %v74 = vadd.f32 %v58, 0.0
    %v75 = vadd.f32 %v61, 0.0
    %v76 = vadd.f32 %v64, 0.0
    %v77 = vadd.f32 %v67, 0.0
    %v78 = vadd.f32 %v70, 0.0
    %s79 = sld [smem:[#allocation2]]
    %v80 = vstv %s79
    %v81 = vadd.f32 %v71, %v80
    %v82 = vadd.f32 %v72, %v80
    %v83 = vadd.f32 %v73, %v80
    %v84 = vadd.f32 %v74, %v80
    %v85 = vadd.f32 %v75, %v80
    %v86 = vadd.f32 %v76, %v80
    %v87 = vadd.f32 %v77, %v80
    %v88 = vadd.f32 %v78, %v80
    %v97 = vrot.slane %v82, 7
    %vm98 = vcmask 1041409
    %v99 = vsel %vm98, %v97, %v81
    %v100 = vrot.slane %v83, 6
    %vm101 = vcmask 1042434
    %v102 = vsel %vm101, %v100, %v99
    %v103 = vrot.slane %v84, 5
    %vm104 = vcmask 1043459
    %v105 = vsel %vm104, %v103, %v102
    %v106 = vrot.slane %v85, 4
    %vm107 = vcmask 1044484
    %v108 = vsel %vm107, %v106, %v105
    %v109 = vrot.slane %v86, 3
    %vm110 = vcmask 1045509
    %v111 = vsel %vm110, %v109, %v108
    %v112 = vrot.slane %v87, 2
    %vm113 = vcmask 1046534
    %v114 = vsel %vm113, %v112, %v111
    %v115 = vrot.slane %v88, 1
    %vm116 = vcmask 1047559
    %v117 = vsel %vm116, %v115, %v114
    %vm119 = vcmask 7168
    %120 = vst.msk [vmem:[%s3] sm:$0xff] %vm119, %v117
    // Predicated region
    $region18: #{tpu_custom_call.1} parent=1 // pred_check
      _
    $region19: #{tpu_custom_call.1} parent=1 // pred_check_branch
      %122 = sbr.rel (0) target = $region21
    $region20: #{tpu_custom_call.1} parent=1 // pred_region
      _
    $region21: #{tpu_custom_call.1} parent=1 // pred_fallthru
      _
    // Predicated region
    $region22: #{tpu_custom_call.1} parent=1 // pred_check
      _
    $region23: #{tpu_custom_call.1} parent=1 // pred_check_branch
      %124 = sbr.rel (0) target = $region25
    $region24: #{tpu_custom_call.1} parent=1 // pred_region
      _
    $region25: #{tpu_custom_call.1} parent=1 // pred_fallthru
      _
    %125 = vsyncpa [#allocation4], 1

</llo_original>
